<compile_context>
chip_gen: v7x
topology: tpu7x:2x2x1
jax: 0.10.0
libtpu: 0.0.40
codegen_flags: <defaults>
</compile_context>

<pallas_src>
import jax
import jax.numpy as jnp
from jax.experimental import pallas as pl
from jax.experimental.pallas import tpu as pltpu

LANE = 128          # TPU lane width
TB_MAX = 256        # max batch tile (keeps f32 intermediates tiny in VMEM)


def _round_up(x, m):
    return ((x + m - 1) // m) * m


def actor_kernel(x_ref, w1_ref, b1_ref, w2_ref, b2_ref, w3_ref, b3_ref, o_ref):
    # Layer 1: Linear + ReLU (bf16 operands, f32 MXU accumulation)
    h1 = jnp.dot(x_ref[...], w1_ref[...], preferred_element_type=jnp.float32)
    h1 = jnp.maximum(h1 + b1_ref[...].astype(jnp.float32), 0.0).astype(jnp.bfloat16)

    # Layer 2: Linear + ReLU
    h2 = jnp.dot(h1, w2_ref[...], preferred_element_type=jnp.float32)
    h2 = jnp.maximum(h2 + b2_ref[...].astype(jnp.float32), 0.0).astype(jnp.bfloat16)

    # Layer 3: Linear + Tanh (output columns beyond n_actions are zero-padded;
    # tanh(0) = 0 so the padded lanes stay harmless).
    h3 = jnp.dot(h2, w3_ref[...], preferred_element_type=jnp.float32)
    h3 = h3 + b3_ref[...].astype(jnp.float32)
    o_ref[...] = jnp.tanh(h3).astype(o_ref.dtype)


def init_params(key, input_dims, n_actions, fc1_dims=256, fc2_dims=256):
    """PyTorch-Linear-style init (uniform +/- 1/sqrt(fan_in)), f32, (in, out) layout."""
    ks = jax.random.split(key, 6)

    def layer(kw, kb, fan_in, fan_out):
        bound = 1.0 / jnp.sqrt(fan_in)
        w = jax.random.uniform(kw, (fan_in, fan_out), jnp.float32, -bound, bound)
        b = jax.random.uniform(kb, (1, fan_out), jnp.float32, -bound, bound)
        return w, b

    w1, b1 = layer(ks[0], ks[1], input_dims, fc1_dims)
    w2, b2 = layer(ks[2], ks[3], fc1_dims, fc2_dims)
    w3, b3 = layer(ks[4], ks[5], fc2_dims, n_actions)
    return {"w1": w1, "b1": b1, "w2": w2, "b2": b2, "w3": w3, "b3": b3}


def prepare_params(p):
    """One-time prep for the kernel: zero-pad input/output feature dims to lane
    multiples and cast everything to bf16."""
    w1, b1, w2, b2, w3, b3 = p["w1"], p["b1"], p["w2"], p["b2"], p["w3"], p["b3"]
    d_in, fc1 = w1.shape
    fc2, n_act = w3.shape
    d_pad = _round_up(d_in, LANE)
    a_pad = _round_up(n_act, LANE)

    w1p = jnp.zeros((d_pad, fc1), jnp.bfloat16).at[:d_in, :].set(w1.astype(jnp.bfloat16))
    w3p = jnp.zeros((fc2, a_pad), jnp.bfloat16).at[:, :n_act].set(w3.astype(jnp.bfloat16))
    b3p = jnp.zeros((1, a_pad), jnp.bfloat16).at[:, :n_act].set(b3.astype(jnp.bfloat16))

    return {
        "w1": w1p, "b1": b1.astype(jnp.bfloat16),
        "w2": w2.astype(jnp.bfloat16), "b2": b2.astype(jnp.bfloat16),
        "w3": w3p, "b3": b3p,
    }


def actor_forward(state, prepared, n_actions):
    """state: (B, input_dims) f32.  prepared: output of prepare_params."""
    w1, b1, w2, b2, w3, b3 = (prepared["w1"], prepared["b1"],
                              prepared["w2"], prepared["b2"],
                              prepared["w3"], prepared["b3"])
    B, d_in = state.shape
    d_pad = w1.shape[0]
    a_pad = w3.shape[1]

    # Zero-pad batch to a multiple of 8 sublanes (and of the batch tile at
    # large batch); zero-pad features to the padded contraction width.
    b_pad = _round_up(max(B, 8), 8)
    if b_pad > TB_MAX:
        tb = TB_MAX
        b_pad = _round_up(b_pad, tb)
    else:
        tb = b_pad
    grid = (b_pad // tb,)

    x = jnp.zeros((b_pad, d_pad), jnp.bfloat16)
    x = x.at[:B, :d_in].set(state.astype(jnp.bfloat16))

    # Weights/biases: full-array blocks with constant index_map -> resident in
    # VMEM across all batch-grid steps.
    const = lambda a: pl.BlockSpec(a.shape, lambda i: (0,) * a.ndim)

    out = pl.pallas_call(
        actor_kernel,
        out_shape=jax.ShapeDtypeStruct((b_pad, a_pad), jnp.float32),
        grid=grid,
        in_specs=[pl.BlockSpec((tb, d_pad), lambda i: (i, 0)),
                  const(w1), const(b1), const(w2), const(b2),
                  const(w3), const(b3)],
        out_specs=pl.BlockSpec((tb, a_pad), lambda i: (i, 0)),
        compiler_params=pltpu.CompilerParams(
            dimension_semantics=("parallel",),
            vmem_limit_bytes=4 << 20),
    )(x, w1, b1, w2, b2, w3, b3)

    return out[:B, :n_actions]


def actor_forward_ref(state, p):
    """Pure-JAX f32 reference (unpadded params)."""
    h1 = jnp.maximum(state @ p["w1"] + p["b1"], 0.0)
    h2 = jnp.maximum(h1 @ p["w2"] + p["b2"], 0.0)
    return jnp.tanh(h2 @ p["w3"] + p["b3"])


# TODO(synk): the Adam optimizer / .to(device) bits of ActorNetwork are training
# infrastructure, not part of the forward pass, so they are not translated.

if __name__ == "__main__":
    key = jax.random.PRNGKey(0)
    k_params, k_state = jax.random.split(key)

    batch = 2
    input_dims = 32
    n_actions = 8

    params_f32 = init_params(k_params, input_dims, n_actions, fc1_dims=256, fc2_dims=256)
    prepared = prepare_params(params_f32)
    state = jax.random.normal(k_state, (batch, input_dims), dtype=jnp.float32)

    out = actor_forward(state, prepared, n_actions)
    out = jax.block_until_ready(out)

    ref = actor_forward_ref(state, params_f32)
    assert out.shape == (batch, n_actions)
    # bf16 weights/activations vs f32 reference -> looser tolerance.
    assert jnp.allclose(out, ref, atol=2e-2, rtol=2e-2), "mismatch vs JAX reference"

    print("KERNEL_OK")
</pallas_src>

<mosaic_0001>
module attributes {stable_mosaic.version = 11 : i64} {
  func.func @actor_kernel(%arg0: i32, %arg1: memref<8x128xbf16, #tpu.memory_space<vmem>>, %arg2: memref<128x256xbf16, #tpu.memory_space<vmem>>, %arg3: memref<1x256xbf16, #tpu.memory_space<vmem>>, %arg4: memref<256x256xbf16, #tpu.memory_space<vmem>>, %arg5: memref<1x256xbf16, #tpu.memory_space<vmem>>, %arg6: memref<256x128xbf16, #tpu.memory_space<vmem>>, %arg7: memref<1x128xbf16, #tpu.memory_space<vmem>>, %arg8: memref<8x128xf32, #tpu.memory_space<vmem>>) attributes {dimension_semantics = [#tpu.dimension_semantics<parallel>], iteration_bounds = array<i64: 1>, scalar_prefetch = 0 : i64, scratch_operands = 0 : i64, tpu.core_type = #tpu.core_type<tc>, window_params = [{transform_indices = @transform_0, window_bounds = array<i64: 8, 128>}, {pipeline_mode = #tpu.pipeline_mode<synchronous>, transform_indices = @transform_1, window_bounds = array<i64: 128, 256>}, {pipeline_mode = #tpu.pipeline_mode<synchronous>, transform_indices = @transform_2, window_bounds = array<i64: 1, 256>}, {pipeline_mode = #tpu.pipeline_mode<synchronous>, transform_indices = @transform_3, window_bounds = array<i64: 256, 256>}, {pipeline_mode = #tpu.pipeline_mode<synchronous>, transform_indices = @transform_4, window_bounds = array<i64: 1, 256>}, {pipeline_mode = #tpu.pipeline_mode<synchronous>, transform_indices = @transform_5, window_bounds = array<i64: 256, 128>}, {pipeline_mode = #tpu.pipeline_mode<synchronous>, transform_indices = @transform_6, window_bounds = array<i64: 1, 128>}, {transform_indices = @transform_7, window_bounds = array<i64: 8, 128>}]} {
    %c0 = arith.constant 0 : index
    %c0_0 = arith.constant 0 : index
    %0 = vector.load %arg1[%c0, %c0_0] : memref<8x128xbf16, #tpu.memory_space<vmem>>, vector<8x128xbf16>
    %c0_1 = arith.constant 0 : index
    %c0_2 = arith.constant 0 : index
    %1 = vector.load %arg2[%c0_1, %c0_2] : memref<128x256xbf16, #tpu.memory_space<vmem>>, vector<128x256xbf16>
    %cst = arith.constant dense<0.000000e+00> : vector<8x256xf32>
    %2 = tpu.matmul %0, %1, %cst {dimension_numbers = #tpu.dot_dimension_numbers<[1], [0], [0], [1], [0, 0, 1, 1], [], []>} : vector<8x128xbf16>, vector<128x256xbf16>, vector<8x256xf32> -> vector<8x256xf32>
    %c0_3 = arith.constant 0 : index
    %c0_4 = arith.constant 0 : index
    %3 = vector.load %arg3[%c0_3, %c0_4] : memref<1x256xbf16, #tpu.memory_space<vmem>>, vector<1x256xbf16>
    %4 = arith.extf %3 : vector<1x256xbf16> to vector<1x256xf32>
    %5 = vector.broadcast %4 : vector<1x256xf32> to vector<8x256xf32>
    %6 = arith.addf %2, %5 : vector<8x256xf32>
    %cst_5 = arith.constant 0.000000e+00 : f32
    %7 = vector.broadcast %cst_5 : f32 to vector<8x256xf32>
    %8 = arith.maximumf %6, %7 : vector<8x256xf32>
    %9 = arith.truncf %8 : vector<8x256xf32> to vector<8x256xbf16>
    %c0_6 = arith.constant 0 : index
    %c0_7 = arith.constant 0 : index
    %10 = vector.load %arg4[%c0_6, %c0_7] : memref<256x256xbf16, #tpu.memory_space<vmem>>, vector<256x256xbf16>
    %cst_8 = arith.constant dense<0.000000e+00> : vector<8x256xf32>
    %11 = tpu.matmul %9, %10, %cst_8 {dimension_numbers = #tpu.dot_dimension_numbers<[1], [0], [0], [1], [0, 0, 1, 1], [], []>} : vector<8x256xbf16>, vector<256x256xbf16>, vector<8x256xf32> -> vector<8x256xf32>
    %c0_9 = arith.constant 0 : index
    %c0_10 = arith.constant 0 : index
    %12 = vector.load %arg5[%c0_9, %c0_10] : memref<1x256xbf16, #tpu.memory_space<vmem>>, vector<1x256xbf16>
    %13 = arith.extf %12 : vector<1x256xbf16> to vector<1x256xf32>
    %14 = vector.broadcast %13 : vector<1x256xf32> to vector<8x256xf32>
    %15 = arith.addf %11, %14 : vector<8x256xf32>
    %cst_11 = arith.constant 0.000000e+00 : f32
    %16 = vector.broadcast %cst_11 : f32 to vector<8x256xf32>
    %17 = arith.maximumf %15, %16 : vector<8x256xf32>
    %18 = arith.truncf %17 : vector<8x256xf32> to vector<8x256xbf16>
    %c0_12 = arith.constant 0 : index
    %c0_13 = arith.constant 0 : index
    %19 = vector.load %arg6[%c0_12, %c0_13] : memref<256x128xbf16, #tpu.memory_space<vmem>>, vector<256x128xbf16>
    %cst_14 = arith.constant dense<0.000000e+00> : vector<8x128xf32>
    %20 = tpu.matmul %18, %19, %cst_14 {dimension_numbers = #tpu.dot_dimension_numbers<[1], [0], [0], [1], [0, 0, 1, 1], [], []>} : vector<8x256xbf16>, vector<256x128xbf16>, vector<8x128xf32> -> vector<8x128xf32>
    %c0_15 = arith.constant 0 : index
    %c0_16 = arith.constant 0 : index
    %21 = vector.load %arg7[%c0_15, %c0_16] : memref<1x128xbf16, #tpu.memory_space<vmem>>, vector<1x128xbf16>
    %22 = arith.extf %21 : vector<1x128xbf16> to vector<1x128xf32>
    %23 = vector.broadcast %22 : vector<1x128xf32> to vector<8x128xf32>
    %24 = arith.addf %20, %23 : vector<8x128xf32>
    %25 = math.tanh %24 : vector<8x128xf32>
    %c0_17 = arith.constant 0 : index
    %c0_18 = arith.constant 0 : index
    %26 = vector.load %arg8[%c0_17, %c0_18] : memref<8x128xf32, #tpu.memory_space<vmem>>, vector<8x128xf32>
    tpu.vector_store %arg8[%c0_17, %c0_18], %25 {strides = array<i32>} : memref<8x128xf32, #tpu.memory_space<vmem>>, vector<8x128xf32>,
    return
  }
  func.func @transform_0(%arg0: i32) -> (i32, i32) {
    %c0_i32 = arith.constant 0 : i32
    %c0_i32_0 = arith.constant 0 : i32
    return %arg0, %c0_i32 : i32, i32
  }
  func.func @transform_1(%arg0: i32) -> (i32, i32) {
    %c0_i32 = arith.constant 0 : i32
    %c0_i32_0 = arith.constant 0 : i32
    %c0_i32_1 = arith.constant 0 : i32
    return %c0_i32, %c0_i32_0 : i32, i32
  }
  func.func @transform_2(%arg0: i32) -> (i32, i32) {
    %c0_i32 = arith.constant 0 : i32
    %c0_i32_0 = arith.constant 0 : i32
    %c0_i32_1 = arith.constant 0 : i32
    return %c0_i32, %c0_i32_0 : i32, i32
  }
  func.func @transform_3(%arg0: i32) -> (i32, i32) {
    %c0_i32 = arith.constant 0 : i32
    %c0_i32_0 = arith.constant 0 : i32
    %c0_i32_1 = arith.constant 0 : i32
    return %c0_i32, %c0_i32_0 : i32, i32
  }
  func.func @transform_4(%arg0: i32) -> (i32, i32) {
    %c0_i32 = arith.constant 0 : i32
    %c0_i32_0 = arith.constant 0 : i32
    %c0_i32_1 = arith.constant 0 : i32
    return %c0_i32, %c0_i32_0 : i32, i32
  }
  func.func @transform_5(%arg0: i32) -> (i32, i32) {
    %c0_i32 = arith.constant 0 : i32
    %c0_i32_0 = arith.constant 0 : i32
    %c0_i32_1 = arith.constant 0 : i32
    return %c0_i32, %c0_i32_0 : i32, i32
  }
  func.func @transform_6(%arg0: i32) -> (i32, i32) {
    %c0_i32 = arith.constant 0 : i32
    %c0_i32_0 = arith.constant 0 : i32
    %c0_i32_1 = arith.constant 0 : i32
    return %c0_i32, %c0_i32_0 : i32, i32
  }
  func.func @transform_7(%arg0: i32) -> (i32, i32) {
    %c0_i32 = arith.constant 0 : i32
    %c0_i32_0 = arith.constant 0 : i32
    return %arg0, %c0_i32 : i32, i32
  }
}

</mosaic_0001>

<llo_original>
// kernel: tpu_custom_call.1
$region0: #{tpu_custom_call.1}
  #allocation0 [shape = 'u32[]', space=smem, size = 0x4, offset = 0x4, fixed_abs, tag = 'smem constant byte address 0x4 - core index']
  #allocation1 [shape = 'u32[144,128]{1,0:T(1,128)}', space=vmem, size = 0x12000, scoped, tag = 'internal scratch']
  %s0 = inlined_call_operand.hbm [shape: bf16[8,128], index: 0, kind: input, shape index: {}]
  %s1 = inlined_call_operand.hbm [shape: bf16[128,256], index: 1, kind: input, shape index: {}]
  %s2 = inlined_call_operand.vmem [shape: bf16[1,256], index: 2, kind: input, shape index: {}]
  %s3 = inlined_call_operand.hbm [shape: bf16[256,256], index: 3, kind: input, shape index: {}]
  %s4 = inlined_call_operand.vmem [shape: bf16[1,256], index: 4, kind: input, shape index: {}]
  %s5 = inlined_call_operand.hbm [shape: bf16[256,128], index: 5, kind: input, shape index: {}]
  %s6 = inlined_call_operand.vmem [shape: bf16[1,128], index: 6, kind: input, shape index: {}]
  %s7 = inlined_call_operand.hbm [shape: f32[8,128], index: 7, kind: output, shape index: {}]
  %s8 = sld [smem:[#allocation0]]
  $region54: #{tpu_custom_call.1} parent=0
    _
  %s10 = ssub.s32 1, %s8
  %s11 = scalar_select 0, %s10, %s8
  $region1: #{tpu_custom_call.1} parent=0
    #allocation2 [shape = 'u8[2048]{0}', space=vmem, size = 0x800, scoped, tag = 'input window, operand 0, single buffered']
    #allocation3 [shape = 's32[1]{0}', space=sflag, size = 0x4, scoped, tag = 'scoped memory for tpu_custom_call.1']
    #allocation4 [shape = 's32[1]{0}', space=sflag, size = 0x4, scoped, tag = 'scoped memory for tpu_custom_call.1']
    #allocation5 [shape = 'u8[65536]{0}', space=vmem, size = 0x10000, scoped, tag = 'input window, operand 1, single buffered']
    #allocation6 [shape = 's32[1]{0}', space=sflag, size = 0x4, scoped, tag = 'scoped memory for tpu_custom_call.1']
    #allocation7 [shape = 'u8[131072]{0}', space=vmem, size = 0x20000, scoped, tag = 'input window, operand 3, single buffered']
    #allocation8 [shape = 'u8[65536]{0}', space=vmem, size = 0x10000, scoped, tag = 'input window, operand 5, single buffered']
    #allocation9 [shape = 's32[1]{0}', space=sflag, size = 0x4, scoped, tag = 'scoped memory for tpu_custom_call.1']
    #allocation10 [shape = 'u8[4096]{0}', space=vmem, size = 0x1000, scoped, tag = 'output window, operand 0, single buffered']
    %12 = vsyncpa [#allocation3], 0
    %13 = vsyncpa [#allocation6], 0
    %14 = vsyncpa [#allocation9], 0
    %15 = vsyncpa [#allocation4], 0
    // Predicated region
    $region2: #{tpu_custom_call.1} parent=1 // pred_check
      _
    $region3: #{tpu_custom_call.1} parent=1 // pred_check_branch
      %17 = sbr.rel (0) target = $region5
    $region4: #{tpu_custom_call.1} parent=1 // pred_region
      %s19 = ssub.s32 64, 64
      %20 = vsyncadd [#allocation3], %s19
      %s22 = sshll.u32 [#allocation2], 4
      %s23 = int_to_ptr.vmem [resolvable:$true] %s22
      %25 = dma.hbm_to_vmem [thread:$0]  %s0, 64, %s23, [#allocation3]
    $region5: #{tpu_custom_call.1} parent=1 // pred_fallthru
      _
    // Predicated region
    $region6: #{tpu_custom_call.1} parent=1 // pred_check
      _
    $region7: #{tpu_custom_call.1} parent=1 // pred_check_branch
      %27 = sbr.rel (0) target = $region9
    $region8: #{tpu_custom_call.1} parent=1 // pred_region
      %s29 = ssub.s32 2048, 2048
      %30 = vsyncadd [#allocation6], %s29
      %s31 = sshll.u32 [#allocation5], 4
      %s32 = int_to_ptr.vmem [resolvable:$true] %s31
      %37 = dma.hbm_to_vmem [thread:$0]  %s1, 2048, %s32, [#allocation6], 128, 128, 8
    $region9: #{tpu_custom_call.1} parent=1 // pred_fallthru
      _
    // Predicated region
    $region10: #{tpu_custom_call.1} parent=1 // pred_check
      _
    $region11: #{tpu_custom_call.1} parent=1 // pred_check_branch
      %39 = sbr.rel (0) target = $region13
    $region12: #{tpu_custom_call.1} parent=1 // pred_region
      _
    $region13: #{tpu_custom_call.1} parent=1 // pred_fallthru
      _
    // Predicated region
    $region14: #{tpu_custom_call.1} parent=1 // pred_check
      _
    $region15: #{tpu_custom_call.1} parent=1 // pred_check_branch
      %41 = sbr.rel (0) target = $region17
    $region16: #{tpu_custom_call.1} parent=1 // pred_region
      %s43 = ssub.s32 4096, 4096
      %44 = vsyncadd [#allocation6], %s43
      %s45 = sshll.u32 [#allocation7], 4
      %s46 = int_to_ptr.vmem [resolvable:$true] %s45
      %51 = dma.hbm_to_vmem [thread:$0]  %s3, 4096, %s46, [#allocation6], 128, 128, 8
    $region17: #{tpu_custom_call.1} parent=1 // pred_fallthru
      _
    // Predicated region
    $region18: #{tpu_custom_call.1} parent=1 // pred_check
      _
    $region19: #{tpu_custom_call.1} parent=1 // pred_check_branch
      %53 = sbr.rel (0) target = $region21
    $region20: #{tpu_custom_call.1} parent=1 // pred_region
      _
    $region21: #{tpu_custom_call.1} parent=1 // pred_fallthru
      _
    // Predicated region
    $region22: #{tpu_custom_call.1} parent=1 // pred_check
      _
    $region23: #{tpu_custom_call.1} parent=1 // pred_check_branch
      %55 = sbr.rel (0) target = $region25
    $region24: #{tpu_custom_call.1} parent=1 // pred_region
      %s57 = ssub.s32 2048, 2048
      %58 = vsyncadd [#allocation9], %s57
      %s59 = sshll.u32 [#allocation8], 4
      %s60 = int_to_ptr.vmem [resolvable:$true] %s59
      %65 = dma.hbm_to_vmem [thread:$0]  %s5, 2048, %s60, [#allocation9], 64, 64, 4
    $region25: #{tpu_custom_call.1} parent=1 // pred_fallthru
      _
    // Predicated region
    $region26: #{tpu_custom_call.1} parent=1 // pred_check
      _
    $region27: #{tpu_custom_call.1} parent=1 // pred_check_branch
      %67 = sbr.rel (0) target = $region29
    $region28: #{tpu_custom_call.1} parent=1 // pred_region
      _
    $region29: #{tpu_custom_call.1} parent=1 // pred_fallthru
      _
    // Predicated region
    $region30: #{tpu_custom_call.1} parent=1 // pred_check
      _
    $region31: #{tpu_custom_call.1} parent=1 // pred_check_branch
      %69 = sbr.rel (0) target = $region33
    $region32: #{tpu_custom_call.1} parent=1 // pred_region
      %70 = dma.done [#allocation3], 64
    $region33: #{tpu_custom_call.1} parent=1 // pred_fallthru
      _
    // Predicated region
    $region34: #{tpu_custom_call.1} parent=1 // pred_check
      _
    $region35: #{tpu_custom_call.1} parent=1 // pred_check_branch
      %72 = sbr.rel (0) target = $region37
    $region36: #{tpu_custom_call.1} parent=1 // pred_region
      %73 = dma.done [#allocation6], 2048
    $region37: #{tpu_custom_call.1} parent=1 // pred_fallthru
      _
    // Predicated region
    $region38: #{tpu_custom_call.1} parent=1 // pred_check
      _
    $region39: #{tpu_custom_call.1} parent=1 // pred_check_branch
      %75 = sbr.rel (0) target = $region41
    $region40: #{tpu_custom_call.1} parent=1 // pred_region
      %76 = dma.done [#allocation6], 4096
    $region41: #{tpu_custom_call.1} parent=1 // pred_fallthru
      _
    // Predicated region
    $region42: #{tpu_custom_call.1} parent=1 // pred_check
      _
    $region43: #{tpu_custom_call.1} parent=1 // pred_check_branch
      %78 = sbr.rel (0) target = $region45
    $region44: #{tpu_custom_call.1} parent=1 // pred_region
      %79 = dma.done [#allocation9], 2048
    $region45: #{tpu_custom_call.1} parent=1 // pred_fallthru
      _
    %v81 = vld [vmem:[#allocation2] sm:$0xf]
    %v82 = vld [vmem:[#allocation5] sm:$0xff]
    %v83 = vld [vmem:[#allocation5 + $0x8] sm:$0xff]
    %v84 = vld [vmem:[#allocation5 + $0x10] sm:$0xff]
    %v85 = vld [vmem:[#allocation5 + $0x18] sm:$0xff]
    %v86 = vld [vmem:[#allocation5 + $0x20] sm:$0xff]
    %v87 = vld [vmem:[#allocation5 + $0x28] sm:$0xff]
    %v88 = vld [vmem:[#allocation5 + $0x30] sm:$0xff]
    %v89 = vld [vmem:[#allocation5 + $0x38] sm:$0xff]
    %v90 = vld [vmem:[#allocation5 + $0x40] sm:$0xff]
    %v91 = vld [vmem:[#allocation5 + $0x48] sm:$0xff]
    %v92 = vld [vmem:[#allocation5 + $0x50] sm:$0xff]
    %v93 = vld [vmem:[#allocation5 + $0x58] sm:$0xff]
    %v94 = vld [vmem:[#allocation5 + $0x60] sm:$0xff]
    %v95 = vld [vmem:[#allocation5 + $0x68] sm:$0xff]
    %v96 = vld [vmem:[#allocation5 + $0x70] sm:$0xff]
    %v97 = vld [vmem:[#allocation5 + $0x78] sm:$0xff]
    %v98 = vld [vmem:[%s2] sm:$0x3]
    %v99 = vunpack.c.l.bf16 %v98
    %v101 = vlaneseq
    %v102 = vshrl.u32 %v101, 7
    %v103 = vsub.s32 0, %v102
    %v104 = vrot.slane %v99, %v103
    %v105 = vlaneseq
    %v106 = vshrl.u32 %v105, 7
    %v107 = vsub.s32 2, %v106
    %v108 = vrot.slane %v99, %v107
    %v111 = vlaneseq
    %v112 = vshrl.u32 %v111, 7
    %v113 = vsub.s32 0, %v112
    %v114 = vrot.slane %v104, %v113
    %v115 = vlaneseq
    %v116 = vshrl.u32 %v115, 7
    %v117 = vsub.s32 0, %v116
    %v118 = vrot.slane %v108, %v117
    %v135 = vunpack.c.l.b16 %v82
    %v136 = vunpack.c.h.b16 %v82
    %v137 = vunpack.c.l.b16 %v83
    %v138 = vunpack.c.h.b16 %v83
    %v139 = vunpack.c.l.b16 %v84
    %v140 = vunpack.c.h.b16 %v84
    %v141 = vunpack.c.l.b16 %v85
    %v142 = vunpack.c.h.b16 %v85
    %v143 = vunpack.c.l.b16 %v86
    %v144 = vunpack.c.h.b16 %v86
    %v145 = vunpack.c.l.b16 %v87
    %v146 = vunpack.c.h.b16 %v87
    %v147 = vunpack.c.l.b16 %v88
    %v148 = vunpack.c.h.b16 %v88
    %v149 = vunpack.c.l.b16 %v89
    %v150 = vunpack.c.h.b16 %v89
    %v151 = vunpack.c.l.b16 %v90
    %v152 = vunpack.c.h.b16 %v90
    %v153 = vunpack.c.l.b16 %v91
    %v154 = vunpack.c.h.b16 %v91
    %v155 = vunpack.c.l.b16 %v92
    %v156 = vunpack.c.h.b16 %v92
    %v157 = vunpack.c.l.b16 %v93
    %v158 = vunpack.c.h.b16 %v93
    %v159 = vunpack.c.l.b16 %v94
    %v160 = vunpack.c.h.b16 %v94
    %v161 = vunpack.c.l.b16 %v95
    %v162 = vunpack.c.h.b16 %v95
    %v163 = vunpack.c.l.b16 %v96
    %v164 = vunpack.c.h.b16 %v96
    %v165 = vunpack.c.l.b16 %v97
    %v166 = vunpack.c.h.b16 %v97
    %v167 = vpack.c.b16 %v137, %v135
    %v168 = vpack.c.b16 %v138, %v136
    %v169 = vpack.c.b16 %v141, %v139
    %v170 = vpack.c.b16 %v142, %v140
    %v171 = vpack.c.b16 %v145, %v143
    %v172 = vpack.c.b16 %v146, %v144
    %v173 = vpack.c.b16 %v149, %v147
    %v174 = vpack.c.b16 %v150, %v148
    %v175 = vpack.c.b16 %v153, %v151
    %v176 = vpack.c.b16 %v154, %v152
    %v177 = vpack.c.b16 %v157, %v155
    %v178 = vpack.c.b16 %v158, %v156
    %v179 = vpack.c.b16 %v161, %v159
    %v180 = vpack.c.b16 %v162, %v160
    %v181 = vpack.c.b16 %v165, %v163
    %v182 = vpack.c.b16 %v166, %v164
    %199 = vmatprep.subr.bf16.mxu0 %v168
    %200 = vmatpush1.bf16.msra.mxu0 %v167
    %201 = vmatprep.subr.bf16.mxu0 %v170
    %202 = vmatpush1.bf16.msra.mxu0 %v169
    %203 = vmatprep.subr.bf16.mxu0 %v172
    %204 = vmatpush1.bf16.msra.mxu0 %v171
    %205 = vmatprep.subr.bf16.mxu0 %v174
    %206 = vmatpush1.bf16.msra.mxu0 %v173
    %207 = vmatprep.subr.bf16.mxu0 %v176
    %208 = vmatpush1.bf16.msra.mxu0 %v175
    %209 = vmatprep.subr.bf16.mxu0 %v178
    %210 = vmatpush1.bf16.msra.mxu0 %v177
    %211 = vmatprep.subr.bf16.mxu0 %v180
    %212 = vmatpush1.bf16.msra.mxu0 %v179
    %213 = vmatprep.subr.bf16.mxu0 %v182
    %214 = vmatpush1.bf16.msra.mxu0 %v181
    %215 = vmatprep.subr.bf16.mxu0 0
    %216 = vmatpush1.bf16.msra.mxu0 0
    %217 = vmatprep.subr.bf16.mxu0 0
    %218 = vmatpush1.bf16.msra.mxu0 0
    %219 = vmatprep.subr.bf16.mxu0 0
    %220 = vmatpush1.bf16.msra.mxu0 0
    %221 = vmatprep.subr.bf16.mxu0 0
    %222 = vmatpush1.bf16.msra.mxu0 0
    %223 = vmatprep.subr.bf16.mxu0 0
    %224 = vmatpush1.bf16.msra.mxu0 0
    %225 = vmatprep.subr.bf16.mxu0 0
    %226 = vmatpush1.bf16.msra.mxu0 0
    %227 = vmatprep.subr.bf16.mxu0 0
    %228 = vmatpush1.bf16.msra.mxu0 0
    %229 = vmatprep.subr.bf16.mxu0 0
    %230 = vmatpush1.bf16.msra.mxu0 0
    %231 = vmatprep.mubr.bf16.mxu0 0
    %232 = vmatmul.mubr.bf16.gmra.mrb[0].mxu0 %v81
    %v233 = vpop.f32.mrb[0].mxu0
    %v234 = vadd.f32 %v114, %v233
    %v235 = vpop.f32.mrb[0].mxu0
    %v236 = vadd.f32 %v118, %v235
    %v237 = vpop.f32.mrb[0].mxu0
    %v238 = vpop.f32.mrb[0].mxu0
    %239 = vdwg.mxu0
    %v240 = vmax.f32 %v234, 0.0
    %v241 = vmax.f32 %v236, 0.0
    %v242 = vpack.c.bf16 %v240, %v240
    %v243 = vpack.c.bf16 %v241, %v241
    %v244 = vld [vmem:[#allocation7] sm:$0xff]
    %v245 = vld [vmem:[#allocation7 + $0x8] sm:$0xff]
    %v246 = vld [vmem:[#allocation7 + $0x10] sm:$0xff]
    %v247 = vld [vmem:[#allocation7 + $0x18] sm:$0xff]
    %v248 = vld [vmem:[#allocation7 + $0x20] sm:$0xff]
    %v249 = vld [vmem:[#allocation7 + $0x28] sm:$0xff]
    %v250 = vld [vmem:[#allocation7 + $0x30] sm:$0xff]
    %v251 = vld [vmem:[#allocation7 + $0x38] sm:$0xff]
    %v252 = vld [vmem:[#allocation7 + $0x40] sm:$0xff]
    %v253 = vld [vmem:[#allocation7 + $0x48] sm:$0xff]
    %v254 = vld [vmem:[#allocation7 + $0x50] sm:$0xff]
    %v255 = vld [vmem:[#allocation7 + $0x58] sm:$0xff]
    %v256 = vld [vmem:[#allocation7 + $0x60] sm:$0xff]
    %v257 = vld [vmem:[#allocation7 + $0x68] sm:$0xff]
    %v258 = vld [vmem:[#allocation7 + $0x70] sm:$0xff]
    %v259 = vld [vmem:[#allocation7 + $0x78] sm:$0xff]
    %v260 = vld [vmem:[#allocation7 + $0x80] sm:$0xff]
    %v261 = vld [vmem:[#allocation7 + $0x88] sm:$0xff]
    %v262 = vld [vmem:[#allocation7 + $0x90] sm:$0xff]
    %v263 = vld [vmem:[#allocation7 + $0x98] sm:$0xff]
    %v264 = vld [vmem:[#allocation7 + $0xa0] sm:$0xff]
    %v265 = vld [vmem:[#allocation7 + $0xa8] sm:$0xff]
    %v266 = vld [vmem:[#allocation7 + $0xb0] sm:$0xff]
    %v267 = vld [vmem:[#allocation7 + $0xb8] sm:$0xff]
    %v268 = vld [vmem:[#allocation7 + $0xc0] sm:$0xff]
    %v269 = vld [vmem:[#allocation7 + $0xc8] sm:$0xff]
    %v270 = vld [vmem:[#allocation7 + $0xd0] sm:$0xff]
    %v271 = vld [vmem:[#allocation7 + $0xd8] sm:$0xff]
    %v272 = vld [vmem:[#allocation7 + $0xe0] sm:$0xff]
    %v273 = vld [vmem:[#allocation7 + $0xe8] sm:$0xff]
    %v274 = vld [vmem:[#allocation7 + $0xf0] sm:$0xff]
    %v275 = vld [vmem:[#allocation7 + $0xf8] sm:$0xff]
    %v276 = vld [vmem:[%s4] sm:$0x3]
    %v277 = vunpack.c.l.bf16 %v276
    %v279 = vlaneseq
    %v280 = vshrl.u32 %v279, 7
    %v281 = vsub.s32 0, %v280
    %v282 = vrot.slane %v277, %v281
    %v283 = vlaneseq
    %v284 = vshrl.u32 %v283, 7
    %v285 = vsub.s32 2, %v284
    %v286 = vrot.slane %v277, %v285
    %v289 = vlaneseq
    %v290 = vshrl.u32 %v289, 7
    %v291 = vsub.s32 0, %v290
    %v292 = vrot.slane %v282, %v291
    %v293 = vlaneseq
    %v294 = vshrl.u32 %v293, 7
    %v295 = vsub.s32 0, %v294
    %v296 = vrot.slane %v286, %v295
    %v329 = vunpack.c.l.b16 %v244
    %v330 = vunpack.c.h.b16 %v244
    %v331 = vunpack.c.l.b16 %v245
    %v332 = vunpack.c.h.b16 %v245
    %v333 = vunpack.c.l.b16 %v246
    %v334 = vunpack.c.h.b16 %v246
    %v335 = vunpack.c.l.b16 %v247
    %v336 = vunpack.c.h.b16 %v247
    %v337 = vunpack.c.l.b16 %v248
    %v338 = vunpack.c.h.b16 %v248
    %v339 = vunpack.c.l.b16 %v249
    %v340 = vunpack.c.h.b16 %v249
    %v341 = vunpack.c.l.b16 %v250
    %v342 = vunpack.c.h.b16 %v250
    %v343 = vunpack.c.l.b16 %v251
    %v344 = vunpack.c.h.b16 %v251
    %v345 = vunpack.c.l.b16 %v252
    %v346 = vunpack.c.h.b16 %v252
    %v347 = vunpack.c.l.b16 %v253
    %v348 = vunpack.c.h.b16 %v253
    %v349 = vunpack.c.l.b16 %v254
    %v350 = vunpack.c.h.b16 %v254
    %v351 = vunpack.c.l.b16 %v255
    %v352 = vunpack.c.h.b16 %v255
    %v353 = vunpack.c.l.b16 %v256
    %v354 = vunpack.c.h.b16 %v256
    %v355 = vunpack.c.l.b16 %v257
    %v356 = vunpack.c.h.b16 %v257
    %v357 = vunpack.c.l.b16 %v258
    %v358 = vunpack.c.h.b16 %v258
    %v359 = vunpack.c.l.b16 %v259
    %v360 = vunpack.c.h.b16 %v259
    %v361 = vunpack.c.l.b16 %v260
    %v362 = vunpack.c.h.b16 %v260
    %v363 = vunpack.c.l.b16 %v261
    %v364 = vunpack.c.h.b16 %v261
    %v365 = vunpack.c.l.b16 %v262
    %v366 = vunpack.c.h.b16 %v262
    %v367 = vunpack.c.l.b16 %v263
    %v368 = vunpack.c.h.b16 %v263
    %v369 = vunpack.c.l.b16 %v264
    %v370 = vunpack.c.h.b16 %v264
    %v371 = vunpack.c.l.b16 %v265
    %v372 = vunpack.c.h.b16 %v265
    %v373 = vunpack.c.l.b16 %v266
    %v374 = vunpack.c.h.b16 %v266
    %v375 = vunpack.c.l.b16 %v267
    %v376 = vunpack.c.h.b16 %v267
    %v377 = vunpack.c.l.b16 %v268
    %v378 = vunpack.c.h.b16 %v268
    %v379 = vunpack.c.l.b16 %v269
    %v380 = vunpack.c.h.b16 %v269
    %v381 = vunpack.c.l.b16 %v270
    %v382 = vunpack.c.h.b16 %v270
    %v383 = vunpack.c.l.b16 %v271
    %v384 = vunpack.c.h.b16 %v271
    %v385 = vunpack.c.l.b16 %v272
    %v386 = vunpack.c.h.b16 %v272
    %v387 = vunpack.c.l.b16 %v273
    %v388 = vunpack.c.h.b16 %v273
    %v389 = vunpack.c.l.b16 %v274
    %v390 = vunpack.c.h.b16 %v274
    %v391 = vunpack.c.l.b16 %v275
    %v392 = vunpack.c.h.b16 %v275
    %v393 = vpack.c.b16 %v331, %v329
    %v394 = vpack.c.b16 %v332, %v330
    %v395 = vpack.c.b16 %v335, %v333
    %v396 = vpack.c.b16 %v336, %v334
    %v397 = vpack.c.b16 %v339, %v337
    %v398 = vpack.c.b16 %v340, %v338
    %v399 = vpack.c.b16 %v343, %v341
    %v400 = vpack.c.b16 %v344, %v342
    %v401 = vpack.c.b16 %v347, %v345
    %v402 = vpack.c.b16 %v348, %v346
    %v403 = vpack.c.b16 %v351, %v349
    %v404 = vpack.c.b16 %v352, %v350
    %v405 = vpack.c.b16 %v355, %v353
    %v406 = vpack.c.b16 %v356, %v354
    %v407 = vpack.c.b16 %v359, %v357
    %v408 = vpack.c.b16 %v360, %v358
    %v409 = vpack.c.b16 %v363, %v361
    %v410 = vpack.c.b16 %v364, %v362
    %v411 = vpack.c.b16 %v367, %v365
    %v412 = vpack.c.b16 %v368, %v366
    %v413 = vpack.c.b16 %v371, %v369
    %v414 = vpack.c.b16 %v372, %v370
    %v415 = vpack.c.b16 %v375, %v373
    %v416 = vpack.c.b16 %v376, %v374
    %v417 = vpack.c.b16 %v379, %v377
    %v418 = vpack.c.b16 %v380, %v378
    %v419 = vpack.c.b16 %v383, %v381
    %v420 = vpack.c.b16 %v384, %v382
    %v421 = vpack.c.b16 %v387, %v385
    %v422 = vpack.c.b16 %v388, %v386
    %v423 = vpack.c.b16 %v391, %v389
    %v424 = vpack.c.b16 %v392, %v390
    %457 = vmatprep.subr.bf16.mxu0 %v394
    %458 = vmatpush1.bf16.msra.mxu0 %v393
    %459 = vmatprep.subr.bf16.mxu0 %v396
    %460 = vmatpush1.bf16.msra.mxu0 %v395
    %461 = vmatprep.subr.bf16.mxu0 %v398
    %462 = vmatpush1.bf16.msra.mxu0 %v397
    %463 = vmatprep.subr.bf16.mxu0 %v400
    %464 = vmatpush1.bf16.msra.mxu0 %v399
    %465 = vmatprep.subr.bf16.mxu0 %v402
    %466 = vmatpush1.bf16.msra.mxu0 %v401
    %467 = vmatprep.subr.bf16.mxu0 %v404
    %468 = vmatpush1.bf16.msra.mxu0 %v403
    %469 = vmatprep.subr.bf16.mxu0 %v406
    %470 = vmatpush1.bf16.msra.mxu0 %v405
    %471 = vmatprep.subr.bf16.mxu0 %v408
    %472 = vmatpush1.bf16.msra.mxu0 %v407
    %473 = vmatprep.subr.bf16.mxu0 %v410
    %474 = vmatpush1.bf16.msra.mxu0 %v409
    %475 = vmatprep.subr.bf16.mxu0 %v412
    %476 = vmatpush1.bf16.msra.mxu0 %v411
    %477 = vmatprep.subr.bf16.mxu0 %v414
    %478 = vmatpush1.bf16.msra.mxu0 %v413
    %479 = vmatprep.subr.bf16.mxu0 %v416
    %480 = vmatpush1.bf16.msra.mxu0 %v415
    %481 = vmatprep.subr.bf16.mxu0 %v418
    %482 = vmatpush1.bf16.msra.mxu0 %v417
    %483 = vmatprep.subr.bf16.mxu0 %v420
    %484 = vmatpush1.bf16.msra.mxu0 %v419
    %485 = vmatprep.subr.bf16.mxu0 %v422
    %486 = vmatpush1.bf16.msra.mxu0 %v421
    %487 = vmatprep.subr.bf16.mxu0 %v424
    %488 = vmatpush1.bf16.msra.mxu0 %v423
    %489 = vmatprep.mubr.bf16.mxu0 %v243
    %490 = vmatmul.mubr.bf16.gmra.mrb[0].mxu0 %v242
    %v491 = vpop.f32.mrb[0].mxu0
    %v492 = vadd.f32 %v292, %v491
    %v493 = vpop.f32.mrb[0].mxu0
    %v494 = vadd.f32 %v296, %v493
    %v495 = vpop.f32.mrb[0].mxu0
    %v496 = vpop.f32.mrb[0].mxu0
    %497 = vdwg.mxu0
    %v498 = vmax.f32 %v492, 0.0
    %v499 = vmax.f32 %v494, 0.0
    %v500 = vpack.c.bf16 %v498, %v498
    %v501 = vpack.c.bf16 %v499, %v499
    %v502 = vld [vmem:[#allocation8] sm:$0xf]
    %v503 = vld [vmem:[#allocation8 + $0x4] sm:$0xf]
    %v504 = vld [vmem:[#allocation8 + $0x8] sm:$0xf]
    %v505 = vld [vmem:[#allocation8 + $0xc] sm:$0xf]
    %v506 = vld [vmem:[#allocation8 + $0x10] sm:$0xf]
    %v507 = vld [vmem:[#allocation8 + $0x14] sm:$0xf]
    %v508 = vld [vmem:[#allocation8 + $0x18] sm:$0xf]
    %v509 = vld [vmem:[#allocation8 + $0x1c] sm:$0xf]
    %v510 = vld [vmem:[#allocation8 + $0x20] sm:$0xf]
    %v511 = vld [vmem:[#allocation8 + $0x24] sm:$0xf]
    %v512 = vld [vmem:[#allocation8 + $0x28] sm:$0xf]
    %v513 = vld [vmem:[#allocation8 + $0x2c] sm:$0xf]
    %v514 = vld [vmem:[#allocation8 + $0x30] sm:$0xf]
    %v515 = vld [vmem:[#allocation8 + $0x34] sm:$0xf]
    %v516 = vld [vmem:[#allocation8 + $0x38] sm:$0xf]
    %v517 = vld [vmem:[#allocation8 + $0x3c] sm:$0xf]
    %v518 = vld [vmem:[#allocation8 + $0x40] sm:$0xf]
    %v519 = vld [vmem:[#allocation8 + $0x44] sm:$0xf]
    %v520 = vld [vmem:[#allocation8 + $0x48] sm:$0xf]
    %v521 = vld [vmem:[#allocation8 + $0x4c] sm:$0xf]
    %v522 = vld [vmem:[#allocation8 + $0x50] sm:$0xf]
    %v523 = vld [vmem:[#allocation8 + $0x54] sm:$0xf]
    %v524 = vld [vmem:[#allocation8 + $0x58] sm:$0xf]
    %v525 = vld [vmem:[#allocation8 + $0x5c] sm:$0xf]
    %v526 = vld [vmem:[#allocation8 + $0x60] sm:$0xf]
    %v527 = vld [vmem:[#allocation8 + $0x64] sm:$0xf]
    %v528 = vld [vmem:[#allocation8 + $0x68] sm:$0xf]
    %v529 = vld [vmem:[#allocation8 + $0x6c] sm:$0xf]
    %v530 = vld [vmem:[#allocation8 + $0x70] sm:$0xf]
    %v531 = vld [vmem:[#allocation8 + $0x74] sm:$0xf]
    %v532 = vld [vmem:[#allocation8 + $0x78] sm:$0xf]
    %v533 = vld [vmem:[#allocation8 + $0x7c] sm:$0xf]
    %v534 = vld [vmem:[%s6] sm:$0x1]
    %v535 = vunpack.c.l.bf16 %v534
    %v536 = vlaneseq
    %v537 = vshrl.u32 %v536, 7
    %v538 = vsub.s32 0, %v537
    %v539 = vrot.slane %v535, %v538
    %v572 = vunpack.c.l.b16 %v502
    %v573 = vunpack.c.l.b16 %v503
    %v574 = vunpack.c.l.b16 %v504
    %v575 = vunpack.c.l.b16 %v505
    %v576 = vunpack.c.l.b16 %v506
    %v577 = vunpack.c.l.b16 %v507
    %v578 = vunpack.c.l.b16 %v508
    %v579 = vunpack.c.l.b16 %v509
    %v580 = vunpack.c.l.b16 %v510
    %v581 = vunpack.c.l.b16 %v511
    %v582 = vunpack.c.l.b16 %v512
    %v583 = vunpack.c.l.b16 %v513
    %v584 = vunpack.c.l.b16 %v514
    %v585 = vunpack.c.l.b16 %v515
    %v586 = vunpack.c.l.b16 %v516
    %v587 = vunpack.c.l.b16 %v517
    %v588 = vunpack.c.l.b16 %v518
    %v589 = vunpack.c.l.b16 %v519
    %v590 = vunpack.c.l.b16 %v520
    %v591 = vunpack.c.l.b16 %v521
    %v592 = vunpack.c.l.b16 %v522
    %v593 = vunpack.c.l.b16 %v523
    %v594 = vunpack.c.l.b16 %v524
    %v595 = vunpack.c.l.b16 %v525
    %v596 = vunpack.c.l.b16 %v526
    %v597 = vunpack.c.l.b16 %v527
    %v598 = vunpack.c.l.b16 %v528
    %v599 = vunpack.c.l.b16 %v529
    %v600 = vunpack.c.l.b16 %v530
    %v601 = vunpack.c.l.b16 %v531
    %v602 = vunpack.c.l.b16 %v532
    %v603 = vunpack.c.l.b16 %v533
    %v604 = vpack.c.b16 %v573, %v572
    %v605 = vpack.c.b16 %v575, %v574
    %v606 = vpack.c.b16 %v577, %v576
    %v607 = vpack.c.b16 %v579, %v578
    %v608 = vpack.c.b16 %v581, %v580
    %v609 = vpack.c.b16 %v583, %v582
    %v610 = vpack.c.b16 %v585, %v584
    %v611 = vpack.c.b16 %v587, %v586
    %v612 = vpack.c.b16 %v589, %v588
    %v613 = vpack.c.b16 %v591, %v590
    %v614 = vpack.c.b16 %v593, %v592
    %v615 = vpack.c.b16 %v595, %v594
    %v616 = vpack.c.b16 %v597, %v596
    %v617 = vpack.c.b16 %v599, %v598
    %v618 = vpack.c.b16 %v601, %v600
    %v619 = vpack.c.b16 %v603, %v602
    %636 = vmatprep.subr.bf16.mxu0 0
    %637 = vmatpush1.bf16.msra.mxu0 %v604
    %638 = vmatprep.subr.bf16.mxu0 0
    %639 = vmatpush1.bf16.msra.mxu0 %v605
    %640 = vmatprep.subr.bf16.mxu0 0
    %641 = vmatpush1.bf16.msra.mxu0 %v606
    %642 = vmatprep.subr.bf16.mxu0 0
    %643 = vmatpush1.bf16.msra.mxu0 %v607
    %644 = vmatprep.subr.bf16.mxu0 0
    %645 = vmatpush1.bf16.msra.mxu0 %v608
    %646 = vmatprep.subr.bf16.mxu0 0
    %647 = vmatpush1.bf16.msra.mxu0 %v609
    %648 = vmatprep.subr.bf16.mxu0 0
    %649 = vmatpush1.bf16.msra.mxu0 %v610
    %650 = vmatprep.subr.bf16.mxu0 0
    %651 = vmatpush1.bf16.msra.mxu0 %v611
    %652 = vmatprep.subr.bf16.mxu0 0
    %653 = vmatpush1.bf16.msra.mxu0 %v612
    %654 = vmatprep.subr.bf16.mxu0 0
    %655 = vmatpush1.bf16.msra.mxu0 %v613
    %656 = vmatprep.subr.bf16.mxu0 0
    %657 = vmatpush1.bf16.msra.mxu0 %v614
    %658 = vmatprep.subr.bf16.mxu0 0
    %659 = vmatpush1.bf16.msra.mxu0 %v615
    %660 = vmatprep.subr.bf16.mxu0 0
    %661 = vmatpush1.bf16.msra.mxu0 %v616
    %662 = vmatprep.subr.bf16.mxu0 0
    %663 = vmatpush1.bf16.msra.mxu0 %v617
    %664 = vmatprep.subr.bf16.mxu0 0
    %665 = vmatpush1.bf16.msra.mxu0 %v618
    %666 = vmatprep.subr.bf16.mxu0 0
    %667 = vmatpush1.bf16.msra.mxu0 %v619
    %668 = vmatprep.mubr.bf16.mxu0 %v501
    %669 = vmatmul.mubr.bf16.gmra.mrb[0].mxu0 %v500
    %v670 = vpop.f32.mrb[0].mxu0
    %v671 = vadd.f32 %v539, %v670
    %v672 = vpop.f32.mrb[0].mxu0
    %v673 = vpop.f32.mrb[0].mxu0
    %v674 = vpop.f32.mrb[0].mxu0
    %675 = vdwg.mxu0
    %v676 = vtanh.pop %v671
    %677 = vst [vmem:[#allocation10] sm:$0xff] %v676
    // Predicated region
    $region46: #{tpu_custom_call.1} parent=1 // pred_check
      _
    $region47: #{tpu_custom_call.1} parent=1 // pred_check_branch
      %679 = sbr.rel (0) target = $region49
    $region48: #{tpu_custom_call.1} parent=1 // pred_region
      %s681 = ssub.s32 128, 128
      %682 = vsyncadd [#allocation4], %s681
      %s684 = sshll.u32 [#allocation10], 4
      %s685 = int_to_ptr.vmem [resolvable:$true] %s684
      %687 = dma.vmem_to_hbm [thread:$0]  %s685, 128, %s7, [#allocation4]
    $region49: #{tpu_custom_call.1} parent=1 // pred_fallthru
      _
    // Predicated region
    $region50: #{tpu_custom_call.1} parent=1 // pred_check
      _
    $region51: #{tpu_custom_call.1} parent=1 // pred_check_branch
      %689 = sbr.rel (0) target = $region53
    $region52: #{tpu_custom_call.1} parent=1 // pred_region
      %690 = dma.done [#allocation4], 128
    $region53: #{tpu_custom_call.1} parent=1 // pred_fallthru
      _
    %691 = vsyncpa [#allocation3], 1
    %692 = vsyncpa [#allocation6], 1
    %693 = vsyncpa [#allocation9], 1
    %694 = vsyncpa [#allocation4], 1

</llo_original>
